<compile_context>
chip_gen: v7x
topology: tpu7x:2x2x1
jax: 0.10.0
libtpu: 0.0.40
codegen_flags: <defaults>
</compile_context>

<pallas_src>
import jax
import jax.numpy as jnp
from jax import lax
from jax.experimental import pallas as pl
from jax.experimental.pallas import tpu as pltpu


def _round_up(x, m):
    return (x + m - 1) // m * m


def _projection_head_kernel(x_ref, w1_ref, b1_ref, w2_ref, b2_ref, o_ref):
    # x_ref : (C_in, TILE_S) f32  -- channels on sublanes, spatial on lanes.
    # w1_ref: (C, C)  bf16 (BN folded)      b1_ref: (C, 1) f32 (BN folded)
    # w2_ref: (P, C)  bf16                  b2_ref: (P, 1) f32
    x = x_ref[...].astype(jnp.bfloat16)

    # Conv3d(dim_in, dim_in, 1) + folded BN + ReLU:  h = relu(W1f @ x + b1f)
    # bf16 MXU inputs, f32 accumulate.
    h = jnp.dot(w1_ref[...], x, preferred_element_type=jnp.float32) + b1_ref[...]
    h = jnp.maximum(h, 0.0).astype(jnp.bfloat16)

    # Conv3d(dim_in, proj_dim, 1):  y = W2^T @ h + b2   (f32 accumulate)
    y = jnp.dot(w2_ref[...], h, preferred_element_type=jnp.float32) + b2_ref[...]

    # F.normalize(y, p=2, dim=channel): channel == sublane axis here.
    # 1/max(||y||, 1e-12) == rsqrt(max(sum(y^2), 1e-24)); reduce on XLU, rsqrt on EUP.
    sumsq = jnp.sum(y * y, axis=0, keepdims=True)            # (1, TILE_S)
    inv = lax.rsqrt(jnp.maximum(sumsq, 1e-24))
    o_ref[...] = (y * inv).astype(o_ref.dtype)


def projection_head_pallas(x_ncdhw, params, *, tile_s=2048):
    """x_ncdhw: (N, C_in, D, H, W) float32. Returns (N, proj_dim, D, H, W) float32."""
    w1, b1, gamma, beta, run_mean, run_var, w2, b2 = (
        params["w1"], params["b1"], params["gamma"], params["beta"],
        params["running_mean"], params["running_var"], params["w2"], params["b2"])
    eps = 1e-5

    N, C, D, H, W = x_ncdhw.shape
    P = w2.shape[1]
    S = D * H * W

    # Fold BN (inference) into the first conv:  (x@W1 + b1)*scale + shift
    #   = x @ (W1*scale) + (b1*scale + shift).
    # Pre-transpose so the kernel computes column-major matmuls (y_col = W @ x_col)
    # and pre-cast the MXU operands to bf16 (biases stay f32, added post-accumulate).
    scale = gamma / jnp.sqrt(run_var + eps)
    shift = beta - run_mean * scale
    w1t = ((w1 * scale[None, :]).T).astype(jnp.bfloat16)       # (C, C)
    b1f = (b1 * scale + shift)[:, None].astype(jnp.float32)    # (C, 1)
    w2t = w2.T.astype(jnp.bfloat16)                            # (P, C)
    b2c = b2[:, None].astype(jnp.float32)                      # (P, 1)

    # NCDHW -> (N, C, S): contiguous reshape; no HBM transpose, no padding copy.
    x3d = x_ncdhw.reshape(N, C, S)

    # ---- tile-size selection -------------------------------------------------
    tile_s = max(128, min(_round_up(tile_s, 128), _round_up(S, 128)))

    def _shrink(t):
        return max(128, _round_up(t // 2, 128))

    # Generation-aware VMEM budget (v7x: 64 MiB/TC, v5e/v6e: 128 MiB).
    try:
        vmem_cap = int(getattr(pltpu.get_tpu_info(), "vmem_capacity_bytes", 64 << 20))
    except Exception:
        vmem_cap = 64 << 20
    vmem_budget = (vmem_cap * 3) // 4   # leave headroom for compiler scratch

    def _vmem_need(t):
        tiles = 2 * (C + P) * t * 4                      # double-buffered x / out (f32)
        inter = (3 * C + 2 * P) * t * 4                  # h(f32) + bf16 copies + y + y*y
        weights = 2 * (2 * C * (C + P) + 4 * (C + P))    # bf16 W1/W2 (x2 bufs) + f32 biases
        return int(tiles + inter + weights + (4 << 20))

    while tile_s > 128 and _vmem_need(tile_s) > vmem_budget:
        tile_s = _shrink(tile_s)

    # Keep enough "parallel" grid steps to balance v7x's two TensorCores.
    while tile_s > 128 and N * pl.cdiv(S, tile_s) < 4:
        tile_s = _shrink(tile_s)

    s_tiles = pl.cdiv(S, tile_s)
    vmem_limit = int(min(vmem_budget, max(16 << 20, _vmem_need(tile_s))))

    cost = pl.CostEstimate(
        flops=2 * N * s_tiles * tile_s * (C * C + C * P),
        transcendentals=N * s_tiles * tile_s,
        bytes_accessed=4 * N * S * (C + P) + 2 * C * (C + P) + 4 * (C + P))

    out3d = pl.pallas_call(
        _projection_head_kernel,
        out_shape=jax.ShapeDtypeStruct((N, P, S), x_ncdhw.dtype),
        grid_spec=pltpu.PrefetchScalarGridSpec(
            num_scalar_prefetch=0,
            grid=(N, s_tiles),
            in_specs=[
                pl.BlockSpec((None, C, tile_s), lambda n, s: (n, 0, s)),  # x tile
                pl.BlockSpec((C, C), lambda n, s: (0, 0)),                # W1 (folded, bf16)
                pl.BlockSpec((C, 1), lambda n, s: (0, 0)),                # b1 (folded, f32)
                pl.BlockSpec((P, C), lambda n, s: (0, 0)),                # W2^T (bf16)
                pl.BlockSpec((P, 1), lambda n, s: (0, 0)),                # b2 (f32)
            ],
            out_specs=pl.BlockSpec((None, P, tile_s), lambda n, s: (n, 0, s)),
        ),
        compiler_params=pltpu.CompilerParams(
            dimension_semantics=("parallel", "parallel"),
            vmem_limit_bytes=vmem_limit),
        cost_estimate=cost,
    )(x3d, w1t, b1f, w2t, b2c)

    return out3d.reshape(N, P, D, H, W)


def projection_head_reference(x_ncdhw, params):
    """Pure-JAX f32 reference mirroring the PyTorch forward (eval-mode BN)."""
    w1, b1, gamma, beta, rm, rv, w2, b2 = (
        params["w1"], params["b1"], params["gamma"], params["beta"],
        params["running_mean"], params["running_var"], params["w2"], params["b2"])
    eps = 1e-5
    N, C, D, H, W = x_ncdhw.shape
    x2d = jnp.transpose(x_ncdhw, (0, 2, 3, 4, 1)).reshape(-1, C)
    h = x2d @ w1 + b1
    h = (h - rm) / jnp.sqrt(rv + eps) * gamma + beta
    h = jnp.maximum(h, 0.0)
    y = h @ w2 + b2
    denom = jnp.maximum(jnp.sqrt(jnp.sum(y * y, axis=-1, keepdims=True)), 1e-12)
    y = y / denom
    P = w2.shape[1]
    return jnp.transpose(y.reshape(N, D, H, W, P), (0, 4, 1, 2, 3))


def make_params(key, dim_in, proj_dim):
    ks = jax.random.split(key, 6)
    # Conv3d 1x1x1 weights stored directly as (C_in, C_out) matrices.
    w1 = jax.random.normal(ks[0], (dim_in, dim_in), jnp.float32) * 0.1
    b1 = jax.random.normal(ks[1], (dim_in,), jnp.float32) * 0.05
    w2 = jax.random.normal(ks[2], (dim_in, proj_dim), jnp.float32) * 0.1
    b2 = jax.random.normal(ks[3], (proj_dim,), jnp.float32) * 0.05
    # BatchNorm3d params + running stats (inference semantics).
    # TODO(synk): training-mode BN (batch statistics + running-stat update) not implemented.
    gamma = 1.0 + 0.1 * jax.random.normal(ks[4], (dim_in,), jnp.float32)
    beta = 0.1 * jax.random.normal(ks[5], (dim_in,), jnp.float32)
    running_mean = jnp.zeros((dim_in,), jnp.float32)
    running_var = jnp.ones((dim_in,), jnp.float32)
    return dict(w1=w1, b1=b1, gamma=gamma, beta=beta,
                running_mean=running_mean, running_var=running_var,
                w2=w2, b2=b2)


if __name__ == "__main__":
    key = jax.random.PRNGKey(0)
    kx, kp = jax.random.split(key)

    N, C_in, D, H, W = 2, 16, 4, 8, 8      # spatial = 4*8*8 = 256 per batch item
    proj_dim = 32

    x = jax.random.normal(kx, (N, C_in, D, H, W), jnp.float32)
    params = make_params(kp, C_in, proj_dim)

    out = projection_head_pallas(x, params)
    out = jax.block_until_ready(out)

    ref = projection_head_reference(x, params)
    assert out.shape == (N, proj_dim, D, H, W)
    # bf16 MXU operands with f32 accumulation -> loosened tolerance vs f32 reference.
    assert jnp.allclose(out, ref, atol=3e-2, rtol=3e-2), "mismatch vs reference"

    print("KERNEL_OK")
</pallas_src>

<mosaic_0001>
module attributes {stable_mosaic.version = 11 : i64} {
  func.func @_projection_head_kernel(%arg0: i32, %arg1: i32, %arg2: memref<1x16x128xf32, #tpu.memory_space<vmem>>, %arg3: memref<16x16xbf16, #tpu.memory_space<vmem>>, %arg4: memref<16x1xf32, #tpu.memory_space<vmem>>, %arg5: memref<32x16xbf16, #tpu.memory_space<vmem>>, %arg6: memref<32x1xf32, #tpu.memory_space<vmem>>, %arg7: memref<1x32x128xf32, #tpu.memory_space<vmem>>) attributes {dimension_semantics = [#tpu.dimension_semantics<parallel>, #tpu.dimension_semantics<parallel>], iteration_bounds = array<i64: 2, 2>, scalar_prefetch = 0 : i64, scratch_operands = 0 : i64, tpu.core_type = #tpu.core_type<tc>, window_params = [{transform_indices = @transform_0, window_bounds = array<i64: 1, 16, 128>}, {pipeline_mode = #tpu.pipeline_mode<synchronous>, transform_indices = @transform_1, window_bounds = array<i64: 16, 16>}, {pipeline_mode = #tpu.pipeline_mode<synchronous>, transform_indices = @transform_2, window_bounds = array<i64: 16, 1>}, {pipeline_mode = #tpu.pipeline_mode<synchronous>, transform_indices = @transform_3, window_bounds = array<i64: 32, 16>}, {pipeline_mode = #tpu.pipeline_mode<synchronous>, transform_indices = @transform_4, window_bounds = array<i64: 32, 1>}, {transform_indices = @transform_5, window_bounds = array<i64: 1, 32, 128>}]} {
    %c0 = arith.constant 0 : index
    %c0_0 = arith.constant 0 : index
    %c0_1 = arith.constant 0 : index
    %0 = vector.load %arg2[%c0, %c0_0, %c0_1] : memref<1x16x128xf32, #tpu.memory_space<vmem>>, vector<1x16x128xf32>
    %1 = vector.shape_cast %0 : vector<1x16x128xf32> to vector<16x128xf32>
    %2 = arith.truncf %1 : vector<16x128xf32> to vector<16x128xbf16>
    %c0_2 = arith.constant 0 : index
    %c0_3 = arith.constant 0 : index
    %3 = vector.load %arg3[%c0_2, %c0_3] : memref<16x16xbf16, #tpu.memory_space<vmem>>, vector<16x16xbf16>
    %cst = arith.constant dense<0.000000e+00> : vector<16x128xf32>
    %4 = tpu.matmul %3, %2, %cst {dimension_numbers = #tpu.dot_dimension_numbers<[1], [0], [0], [1], [0, 0, 1, 1], [], []>} : vector<16x16xbf16>, vector<16x128xbf16>, vector<16x128xf32> -> vector<16x128xf32>
    %c0_4 = arith.constant 0 : index
    %c0_5 = arith.constant 0 : index
    %5 = vector.load %arg4[%c0_4, %c0_5] : memref<16x1xf32, #tpu.memory_space<vmem>>, vector<16x1xf32>
    %6 = vector.broadcast %5 : vector<16x1xf32> to vector<16x128xf32>
    %7 = arith.addf %4, %6 : vector<16x128xf32>
    %cst_6 = arith.constant 0.000000e+00 : f32
    %8 = vector.broadcast %cst_6 : f32 to vector<16x128xf32>
    %9 = arith.maximumf %7, %8 : vector<16x128xf32>
    %10 = arith.truncf %9 : vector<16x128xf32> to vector<16x128xbf16>
    %c0_7 = arith.constant 0 : index
    %c0_8 = arith.constant 0 : index
    %11 = vector.load %arg5[%c0_7, %c0_8] : memref<32x16xbf16, #tpu.memory_space<vmem>>, vector<32x16xbf16>
    %cst_9 = arith.constant dense<0.000000e+00> : vector<32x128xf32>
    %12 = tpu.matmul %11, %10, %cst_9 {dimension_numbers = #tpu.dot_dimension_numbers<[1], [0], [0], [1], [0, 0, 1, 1], [], []>} : vector<32x16xbf16>, vector<16x128xbf16>, vector<32x128xf32> -> vector<32x128xf32>
    %c0_10 = arith.constant 0 : index
    %c0_11 = arith.constant 0 : index
    %13 = vector.load %arg6[%c0_10, %c0_11] : memref<32x1xf32, #tpu.memory_space<vmem>>, vector<32x1xf32>
    %14 = vector.broadcast %13 : vector<32x1xf32> to vector<32x128xf32>
    %15 = arith.addf %12, %14 : vector<32x128xf32>
    %16 = arith.mulf %15, %15 : vector<32x128xf32>
    %cst_12 = arith.constant dense<0.000000e+00> : vector<128xf32>
    %17 = vector.multi_reduction <add>, %16, %cst_12 [0] : vector<32x128xf32> to vector<128xf32>
    %18 = vector.shape_cast %17 : vector<128xf32> to vector<1x128xf32>
    %cst_13 = arith.constant 1.000000e-24 : f32
    %19 = vector.broadcast %cst_13 : f32 to vector<1x128xf32>
    %20 = arith.maximumf %18, %19 : vector<1x128xf32>
    %21 = math.rsqrt %20 : vector<1x128xf32>
    %22 = vector.broadcast %21 : vector<1x128xf32> to vector<32x128xf32>
    %23 = arith.mulf %15, %22 : vector<32x128xf32>
    %c0_14 = arith.constant 0 : index
    %c0_15 = arith.constant 0 : index
    %c0_16 = arith.constant 0 : index
    %24 = vector.load %arg7[%c0_14, %c0_15, %c0_16] : memref<1x32x128xf32, #tpu.memory_space<vmem>>, vector<1x32x128xf32>
    %25 = vector.shape_cast %24 : vector<1x32x128xf32> to vector<32x128xf32>
    %26 = vector.shape_cast %23 : vector<32x128xf32> to vector<1x32x128xf32>
    tpu.vector_store %arg7[%c0_14, %c0_15, %c0_16], %26 {strides = array<i32>} : memref<1x32x128xf32, #tpu.memory_space<vmem>>, vector<1x32x128xf32>,
    return
  }
  func.func @transform_0(%arg0: i32, %arg1: i32) -> (i32, i32, i32) {
    %c0_i32 = arith.constant 0 : i32
    %c0_i32_0 = arith.constant 0 : i32
    return %arg0, %c0_i32, %arg1 : i32, i32, i32
  }
  func.func @transform_1(%arg0: i32, %arg1: i32) -> (i32, i32) {
    %c0_i32 = arith.constant 0 : i32
    %c0_i32_0 = arith.constant 0 : i32
    %c0_i32_1 = arith.constant 0 : i32
    return %c0_i32, %c0_i32_0 : i32, i32
  }
  func.func @transform_2(%arg0: i32, %arg1: i32) -> (i32, i32) {
    %c0_i32 = arith.constant 0 : i32
    %c0_i32_0 = arith.constant 0 : i32
    %c0_i32_1 = arith.constant 0 : i32
    return %c0_i32, %c0_i32_0 : i32, i32
  }
  func.func @transform_3(%arg0: i32, %arg1: i32) -> (i32, i32) {
    %c0_i32 = arith.constant 0 : i32
    %c0_i32_0 = arith.constant 0 : i32
    %c0_i32_1 = arith.constant 0 : i32
    return %c0_i32, %c0_i32_0 : i32, i32
  }
  func.func @transform_4(%arg0: i32, %arg1: i32) -> (i32, i32) {
    %c0_i32 = arith.constant 0 : i32
    %c0_i32_0 = arith.constant 0 : i32
    %c0_i32_1 = arith.constant 0 : i32
    return %c0_i32, %c0_i32_0 : i32, i32
  }
  func.func @transform_5(%arg0: i32, %arg1: i32) -> (i32, i32, i32) {
    %c0_i32 = arith.constant 0 : i32
    %c0_i32_0 = arith.constant 0 : i32
    return %arg0, %c0_i32, %arg1 : i32, i32, i32
  }
}

</mosaic_0001>

<llo_original>
// kernel: tpu_custom_call.1
$region0: #{tpu_custom_call.1}
  #allocation0 [shape = 'u32[]', space=smem, size = 0x4, offset = 0x4, fixed_abs, tag = 'smem constant byte address 0x4 - core index']
  #allocation1 [shape = 'u32[144,128]{1,0:T(1,128)}', space=vmem, size = 0x12000, scoped, tag = 'internal scratch']
  %s0 = inlined_call_operand.vmem [shape: f32[2,16,256], index: 0, kind: input, shape index: {}]
  %s1 = inlined_call_operand.hbm [shape: bf16[16,16], index: 1, kind: input, shape index: {}]
  %s2 = inlined_call_operand.vmem [shape: f32[16,1], index: 2, kind: input, shape index: {}]
  %s3 = inlined_call_operand.vmem [shape: bf16[32,16], index: 3, kind: input, shape index: {}]
  %s4 = inlined_call_operand.vmem [shape: f32[32,1], index: 4, kind: input, shape index: {}]
  %s5 = inlined_call_operand.hbm [shape: f32[2,32,256], index: 5, kind: output, shape index: {}]
  %s6 = sld [smem:[#allocation0]]
  $region95: #{tpu_custom_call.1} parent=0
    _
  %s8 = ssub.s32 1, %s6
  %s9 = scalar_select 0, %s8, %s6
  $region1: #{tpu_custom_call.1} parent=0
    #allocation2 [shape = 'u8[16384]{0}', space=vmem, size = 0x4000, scoped, tag = 'input window, operand 0']
    #allocation3 [shape = 'u8[4096]{0}', space=vmem, size = 0x1000, scoped, tag = 'input window, operand 1, single buffered']
    #allocation4 [shape = 's32[2]{0}', space=sflag, size = 0x8, scoped, tag = 'scoped memory for tpu_custom_call.1']
    #allocation5 [shape = 's32[2]{0}', space=sflag, size = 0x8, scoped, tag = 'scoped memory for tpu_custom_call.1']
    #allocation6 [shape = 'u8[32768]{0}', space=vmem, size = 0x8000, scoped, tag = 'output window, operand 0']
    %10 = vsyncpa [#allocation4], 0
    %11 = vsyncpa [#allocation5], 0
    %s12 = scalar_lea.sflag [#allocation5], 1
    %13 = vsyncpa %s12, 0
    loop: start=0, step=1, limit=6
    $region2: #{tpu_custom_call.1} parent=1 // loop_pre_header
      _
    $region3: #{tpu_custom_call.1} parent=1 // loop_header
      %s15 = sphi 0, %s19
      %p16 = scmp.ge.s32.totalorder %s15, 6
      %s22 = sphi 0, %s34
      %s23 = sphi 0, %s30
      %s24 = sphi 0, %s22
      %s25 = sphi 0, %s23
      %s26 = sphi 0, %s24
      %s27 = sphi 0, %s25
      %s39 = sphi 0, %s41
      %s42 = sphi 0, %s39
      %s43 = sphi 0, %s42
      %s59 = sphi 0, %s43
      %s63 = sphi 0, %s63
      %s65 = sphi 0, %s63
      %s66 = sphi 0, %s65
      %s80 = sphi 0, %s66
      %s84 = sphi 0, %s84
      %s86 = sphi 0, %s84
      %s87 = sphi 0, %s86
      %s101 = sphi 0, %s87
      %s105 = sphi 0, %s105
      %s107 = sphi 0, %s105
      %s108 = sphi 0, %s107
      %s122 = sphi 0, %s108
      %s126 = sphi 0, %s126
      %s128 = sphi 0, %s126
      %s129 = sphi 0, %s128
      %s143 = sphi 0, %s129
      %s151 = sphi 0, %s153
      %s154 = sphi 0, %s151
      %s155 = sphi 0, %s154
      %s171 = sphi 0, %s155
    $region4: #{tpu_custom_call.1} parent=1 // loop_header_branch
      %18 = sbr.rel (%p16) target = $region8
    $region5: #{tpu_custom_call.1} parent=1 // loop_body
      %s20 = ssub.s32 %s15, 1
      %s21 = ssub.s32 %s15, 2
      %s28 = sadd.s32 1, %s23
      %p29 = scmp.ge.s32.totalorder %s28, 2
      %s30 = scalar_select %p29, 0, %s28
      %s31 = sadd.s32 1, %s22
      %s32 = scalar_select %p29, %s31, %s22
      %p33 = scmp.ge.s32.totalorder %s32, 2
      %s34 = scalar_select %p33, 0, %s32
      %s35 = ssub.s32 %s22, %s34
      %s36 = ssub.s32 %s23, %s30
      %s37 = sor.u32 %s35, %s36
      %p38 = scmp.eq.s32.totalorder %s37, 0
      %s40 = sadd.s32 %s39, 1
      %s41 = scalar_select %p38, %s39, %s40
      %p44 = pneg %p38
      %p45 = scmp.eq.s32.totalorder %s15, 3
      %p46 = por %p44, %p45
      %p47 = scmp.ne.s32.totalorder %s39, %s42
      %p48 = scmp.eq.s32.totalorder %s15, 0
      %p49 = por %p47, %p48
      %p50 = scmp.ne.s32.totalorder %s39, %s42
      %p51 = scmp.eq.s32.totalorder %s20, 3
      %p52 = por %p50, %p51
      %p53 = scmp.ne.s32.totalorder %s42, %s43
      %p54 = scmp.eq.s32.totalorder %s20, 0
      %p55 = por %p53, %p54
      %p56 = scmp.ne.s32.totalorder %s42, %s43
      %p57 = scmp.eq.s32.totalorder %s21, 3
      %p58 = por %p56, %p57
      %p60 = scmp.ne.s32.totalorder %s43, %s59
      %p61 = scmp.eq.s32.totalorder %s21, 0
      %p62 = por %p60, %p61
      %s64 = sadd.s32 %s63, 1
      %p67 = scmp.eq.s32.totalorder %s15, 3
      %p68 = scmp.ne.s32.totalorder %s63, %s65
      %p69 = scmp.eq.s32.totalorder %s15, 0
      %p70 = por %p68, %p69
      %p71 = scmp.ne.s32.totalorder %s63, %s65
      %p72 = scmp.eq.s32.totalorder %s20, 3
      %p73 = por %p71, %p72
      %p74 = scmp.ne.s32.totalorder %s65, %s66
      %p75 = scmp.eq.s32.totalorder %s20, 0
      %p76 = por %p74, %p75
      %p77 = scmp.ne.s32.totalorder %s65, %s66
      %p78 = scmp.eq.s32.totalorder %s21, 3
      %p79 = por %p77, %p78
      %p81 = scmp.ne.s32.totalorder %s66, %s80
      %p82 = scmp.eq.s32.totalorder %s21, 0
      %p83 = por %p81, %p82
      %s85 = sadd.s32 %s84, 1
      %p88 = scmp.eq.s32.totalorder %s15, 3
      %p89 = scmp.ne.s32.totalorder %s84, %s86
      %p90 = scmp.eq.s32.totalorder %s15, 0
      %p91 = por %p89, %p90
      %p92 = scmp.ne.s32.totalorder %s84, %s86
      %p93 = scmp.eq.s32.totalorder %s20, 3
      %p94 = por %p92, %p93
      %p95 = scmp.ne.s32.totalorder %s86, %s87
      %p96 = scmp.eq.s32.totalorder %s20, 0
      %p97 = por %p95, %p96
      %p98 = scmp.ne.s32.totalorder %s86, %s87
      %p99 = scmp.eq.s32.totalorder %s21, 3
      %p100 = por %p98, %p99
      %p102 = scmp.ne.s32.totalorder %s87, %s101
      %p103 = scmp.eq.s32.totalorder %s21, 0
      %p104 = por %p102, %p103
      %s106 = sadd.s32 %s105, 1
      %p109 = scmp.eq.s32.totalorder %s15, 3
      %p110 = scmp.ne.s32.totalorder %s105, %s107
      %p111 = scmp.eq.s32.totalorder %s15, 0
      %p112 = por %p110, %p111
      %p113 = scmp.ne.s32.totalorder %s105, %s107
      %p114 = scmp.eq.s32.totalorder %s20, 3
      %p115 = por %p113, %p114
      %p116 = scmp.ne.s32.totalorder %s107, %s108
      %p117 = scmp.eq.s32.totalorder %s20, 0
      %p118 = por %p116, %p117
      %p119 = scmp.ne.s32.totalorder %s107, %s108
      %p120 = scmp.eq.s32.totalorder %s21, 3
      %p121 = por %p119, %p120
      %p123 = scmp.ne.s32.totalorder %s108, %s122
      %p124 = scmp.eq.s32.totalorder %s21, 0
      %p125 = por %p123, %p124
      %s127 = sadd.s32 %s126, 1
      %p130 = scmp.eq.s32.totalorder %s15, 3
      %p131 = scmp.ne.s32.totalorder %s126, %s128
      %p132 = scmp.eq.s32.totalorder %s15, 0
      %p133 = por %p131, %p132
      %p134 = scmp.ne.s32.totalorder %s126, %s128
      %p135 = scmp.eq.s32.totalorder %s20, 3
      %p136 = por %p134, %p135
      %p137 = scmp.ne.s32.totalorder %s128, %s129
      %p138 = scmp.eq.s32.totalorder %s20, 0
      %p139 = por %p137, %p138
      %p140 = scmp.ne.s32.totalorder %s128, %s129
      %p141 = scmp.eq.s32.totalorder %s21, 3
      %p142 = por %p140, %p141
      %p144 = scmp.ne.s32.totalorder %s129, %s143
      %p145 = scmp.eq.s32.totalorder %s21, 0
      %p146 = por %p144, %p145
      %s147 = ssub.s32 %s22, %s34
      %s148 = ssub.s32 %s23, %s30
      %s149 = sor.u32 %s147, %s148
      %p150 = scmp.eq.s32.totalorder %s149, 0
      %s152 = sadd.s32 %s151, 1
      %s153 = scalar_select %p150, %s151, %s152
      %p156 = pneg %p150
      %p157 = scmp.eq.s32.totalorder %s15, 3
      %p158 = por %p156, %p157
      %p159 = scmp.ne.s32.totalorder %s151, %s154
      %p160 = scmp.eq.s32.totalorder %s15, 0
      %p161 = por %p159, %p160
      %p162 = scmp.ne.s32.totalorder %s151, %s154
      %p163 = scmp.eq.s32.totalorder %s20, 3
      %p164 = por %p162, %p163
      %p165 = scmp.ne.s32.totalorder %s154, %s155
      %p166 = scmp.eq.s32.totalorder %s20, 0
      %p167 = por %p165, %p166
      %p168 = scmp.ne.s32.totalorder %s154, %s155
      %p169 = scmp.eq.s32.totalorder %s21, 3
      %p170 = por %p168, %p169
      %p172 = scmp.ne.s32.totalorder %s155, %s171
      %p173 = scmp.eq.s32.totalorder %s21, 0
      %p174 = por %p172, %p173
      %p175 = scmp.le.s32.totalorder 1, %s15
      %p176 = scmp.lt.s32.totalorder %s15, 5
      %p177 = pnand %p175, %p176
      %p178 = pneg %p177
      // Predicated region
      $region9: #{tpu_custom_call.1} parent=5 // pred_check
        _
      $region10: #{tpu_custom_call.1} parent=5 // pred_check_branch
        %180 = sbr.rel (%p177) target = $region12
      $region11: #{tpu_custom_call.1} parent=5 // pred_region
        %s181 = ssub.s32 %s15, 1
        // Predicated region
        $region13: #{tpu_custom_call.1} parent=11 // pred_check
          %p182 = pneg %p76
        $region14: #{tpu_custom_call.1} parent=11 // pred_check_branch
          %184 = sbr.rel (%p182) target = $region16
        $region15: #{tpu_custom_call.1} parent=11 // pred_region
          %s186 = ssub.s32 128, 128
          %187 = vsyncadd [#allocation4], %s186
          %s188 = sshll.u32 [#allocation3], 4
          %s189 = int_to_ptr.vmem [resolvable:$true] %s188
          %194 = dma.hbm_to_vmem [thread:$0]  %s1, 128, %s189, [#allocation4], 64, 64, 4
        $region16: #{tpu_custom_call.1} parent=11 // pred_fallthru
          _
        // Predicated region
        $region17: #{tpu_custom_call.1} parent=11 // pred_check
          %p195 = pneg %p97
        $region18: #{tpu_custom_call.1} parent=11 // pred_check_branch
          %197 = sbr.rel (%p195) target = $region20
        $region19: #{tpu_custom_call.1} parent=11 // pred_region
          _
        $region20: #{tpu_custom_call.1} parent=11 // pred_fallthru
          _
        // Predicated region
        $region21: #{tpu_custom_call.1} parent=11 // pred_check
          %p198 = pneg %p118
        $region22: #{tpu_custom_call.1} parent=11 // pred_check_branch
          %200 = sbr.rel (%p198) target = $region24
        $region23: #{tpu_custom_call.1} parent=11 // pred_region
          _
        $region24: #{tpu_custom_call.1} parent=11 // pred_fallthru
          _
        // Predicated region
        $region25: #{tpu_custom_call.1} parent=11 // pred_check
          %p201 = pneg %p139
        $region26: #{tpu_custom_call.1} parent=11 // pred_check_branch
          %203 = sbr.rel (%p201) target = $region28
        $region27: #{tpu_custom_call.1} parent=11 // pred_region
          _
        $region28: #{tpu_custom_call.1} parent=11 // pred_fallthru
          _
      $region12: #{tpu_custom_call.1} parent=5 // pred_fallthru
        _
      %p204 = scmp.lt.s32.totalorder %s15, 4
      // Predicated region
      $region29: #{tpu_custom_call.1} parent=5 // pred_check
        %p205 = pneg %p204
      $region30: #{tpu_custom_call.1} parent=5 // pred_check_branch
        %207 = sbr.rel (%p205) target = $region32
      $region31: #{tpu_custom_call.1} parent=5 // pred_region
        // Predicated region
        $region33: #{tpu_custom_call.1} parent=31 // pred_check
          %p208 = pneg %p49
        $region34: #{tpu_custom_call.1} parent=31 // pred_check_branch
          %210 = sbr.rel (%p208) target = $region36
        $region35: #{tpu_custom_call.1} parent=31 // pred_region
          %s211 = sand.u32 %s39, 1
          %s212 = sand.u32 %s39, 1
          %s213 = smul.addr %s212, 16
          %s214 = scalar_lea.vmem [#allocation2], %s213
          %s215 = smul.addr %s22, 4
          %s216 = sadd.s32 %s23, %s215
          %s217 = smul.addr %s216, 8
          %s218 = scalar_lea.vmem %s0, %s217
          // Predicated region
          $region37: #{tpu_custom_call.1} parent=35 // pred_check
            _
          $region38: #{tpu_custom_call.1} parent=35 // pred_check_branch
            %220 = sbr.rel (0) target = $region40
          $region39: #{tpu_custom_call.1} parent=35 // pred_region
            // Predicated region
            $region41: #{tpu_custom_call.1} parent=39 // pred_check
              _
            $region42: #{tpu_custom_call.1} parent=39 // pred_check_branch
              %222 = sbr.rel (0) target = $region44
            $region43: #{tpu_custom_call.1} parent=39 // pred_region
              // Predicated region
              $region56: #{tpu_custom_call.1} parent=43 // pred_check
                _
              $region57: #{tpu_custom_call.1} parent=43 // pred_check_branch
                %239 = sbr.rel (0) target = $region59
              $region58: #{tpu_custom_call.1} parent=43 // pred_region
                loop: start=0, step=1, limit=1
                $region60: #{tpu_custom_call.1} parent=58 // loop_pre_header
                  _
                $region61: #{tpu_custom_call.1} parent=58 // loop_header
                  %s241 = sphi 0, %s245
                  %p242 = scmp.ge.s32.totalorder %s241, 1
                  %s246 = sphi %s218, %s218
                  %s247 = sphi %s214, %s214
                $region62: #{tpu_custom_call.1} parent=58 // loop_header_branch
                  %244 = sbr.rel (%p242) target = $region66
                $region63: #{tpu_custom_call.1} parent=58 // loop_body
                  %v248 = vld [vmem:[%s246] sm:$0xff]
                  %249 = vst [vmem:[%s247] sm:$0xff] %v248
                  %v250 = vld [vmem:[%s246 + $0x10] sm:$0xff]
                  %251 = vst [vmem:[%s247 + $0x8] sm:$0xff] %v250
                $region64: #{tpu_custom_call.1} parent=58 // loop_footer
                  %s245 = sadd.s32 1, %s241
                $region65: #{tpu_custom_call.1} parent=58 // loop_footer_branch
                  %240 = sbr.rel target = $region61
                $region66: #{tpu_custom_call.1} parent=58 // loop_exit
                  _
              $region59: #{tpu_custom_call.1} parent=43 // pred_fallthru
                _
              // Predicated region
              $region67: #{tpu_custom_call.1} parent=43 // pred_check
                _
              $region68: #{tpu_custom_call.1} parent=43 // pred_check_branch
                %253 = sbr.rel target = $region70
              $region69: #{tpu_custom_call.1} parent=43 // pred_region
                _
              $region70: #{tpu_custom_call.1} parent=43 // pred_fallthru
                _
            $region44: #{tpu_custom_call.1} parent=39 // pred_fallthru
              _
            // Predicated region
            $region45: #{tpu_custom_call.1} parent=39 // pred_check
              _
            $region46: #{tpu_custom_call.1} parent=39 // pred_check_branch
              %224 = sbr.rel target = $region48
            $region47: #{tpu_custom_call.1} parent=39 // pred_region
              loop: start=0, step=1, limit=1
              $region49: #{tpu_custom_call.1} parent=47 // loop_pre_header
                _
              $region50: #{tpu_custom_call.1} parent=47 // loop_header
                %s227 = sphi 0, %s231
                %p228 = scmp.ge.s32.totalorder %s227, 1
                %s232 = sphi %s218, %s218
                %s233 = sphi %s214, %s214
              $region51: #{tpu_custom_call.1} parent=47 // loop_header_branch
                %230 = sbr.rel (%p228) target = $region55
              $region52: #{tpu_custom_call.1} parent=47 // loop_body
                %v234 = vld [vmem:[%s232] sm:$0xff]
                %235 = vst [vmem:[%s233] sm:$0xff] %v234
                %v236 = vld [vmem:[%s232 + $0x10] sm:$0xff]
                %237 = vst [vmem:[%s233 + $0x8] sm:$0xff] %v236
              $region53: #{tpu_custom_call.1} parent=47 // loop_footer
                %s231 = sadd.s32 1, %s227
              $region54: #{tpu_custom_call.1} parent=47 // loop_footer_branch
                %226 = sbr.rel target = $region50
              $region55: #{tpu_custom_call.1} parent=47 // loop_exit
                _
            $region48: #{tpu_custom_call.1} parent=39 // pred_fallthru
              _
          $region40: #{tpu_custom_call.1} parent=35 // pred_fallthru
            _
          %254 = vnop
        $region36: #{tpu_custom_call.1} parent=31 // pred_fallthru
          _
      $region32: #{tpu_custom_call.1} parent=5 // pred_fallthru
        _
      %p255 = scmp.le.s32.totalorder 1, %s15
      %p256 = scmp.lt.s32.totalorder %s15, 5
      %p257 = pnand %p255, %p256
      %p258 = pneg %p257
      // Predicated region
      $region71: #{tpu_custom_call.1} parent=5 // pred_check
        _
      $region72: #{tpu_custom_call.1} parent=5 // pred_check_branch
        %260 = sbr.rel (%p257) target = $region74
      $region73: #{tpu_custom_call.1} parent=5 // pred_region
        %s261 = ssub.s32 %s15, 1
        %s262 = sand.u32 %s42, 1
        %s263 = sand.u32 %s42, 1
        %s264 = smul.addr %s263, 16
        %s265 = scalar_lea.vmem [#allocation2], %s264
        // Predicated region
        $region75: #{tpu_custom_call.1} parent=73 // pred_check
          %p266 = pneg %p55
        $region76: #{tpu_custom_call.1} parent=73 // pred_check_branch
          %268 = sbr.rel (%p266) target = $region78
        $region77: #{tpu_custom_call.1} parent=73 // pred_region
          _
        $region78: #{tpu_custom_call.1} parent=73 // pred_fallthru
          _
        // Predicated region
        $region79: #{tpu_custom_call.1} parent=73 // pred_check
          %p269 = pneg %p76
        $region80: #{tpu_custom_call.1} parent=73 // pred_check_branch
          %271 = sbr.rel (%p269) target = $region82
        $region81: #{tpu_custom_call.1} parent=73 // pred_region
          %272 = dma.done [#allocation4], 128
        $region82: #{tpu_custom_call.1} parent=73 // pred_fallthru
          _
        %s273 = sand.u32 %s42, 1
        %s274 = sand.u32 %s42, 1
        %s275 = smul.addr %s274, 16
        %s276 = scalar_lea.vmem [#allocation2], %s275
        %p277 = pneg %p55
        %p278 = pneg %p52
        %p279 = pneg %p76
        %p280 = pneg %p73
        %p281 = pneg %p97
        %p282 = pneg %p94
        %p283 = pneg %p118
        %p284 = pneg %p115
        %p285 = pneg %p139
        %p286 = pneg %p136
        %p287 = pneg %p167
        %p288 = pneg %p164
        %s289 = sand.u32 %s154, 1
        %s290 = scalar_lea.sflag [#allocation5], %s289
        %s291 = sand.u32 %s154, 1
        %s292 = smul.addr %s291, 32
        %s293 = scalar_lea.vmem [#allocation6], %s292
        %v295 = vld [vmem:[%s265] sm:$0xff]
        %v296 = vld [vmem:[%s265 + $0x8] sm:$0xff]
        %v297 = vpack.c.bf16 %v296, %v295
        %v298 = vld [vmem:[#allocation3] sm:$0xf]
        %v299 = vld [vmem:[#allocation3 + $0x4] sm:$0xf]
        %v300 = vld [vmem:[%s2] sm:$0xff]
        %v301 = vld [vmem:[%s2 + $0x8] sm:$0xff]
        %303 = vset.pattern.permute.xlu0 0
        %304 = vperm.xlu0 %303, %v300
        %v305 = vpop.permute.xlu0 %304
        %308 = vset.pattern.permute.xlu0 0
        %309 = vperm.xlu0 %308, %v301
        %v310 = vpop.permute.xlu0 %309
        %v314 = vunpack.c.l.b16 %v298
        %v315 = vunpack.c.l.b16 %v299
        %v316 = vpack.c.b16 %v315, %v314
        %vm317 = vcmask 130048
        %v319 = vsel %vm317, %v316, 0
        %321 = vmatprep.subr.bf16.mxu0 0
        %322 = vmatpush1.bf16.msra.mxu0 %v297
        %323 = vmatprep.subr.bf16.mxu0 0
        %324 = vmatpush1.bf16.msra.mxu0 0
        %325 = vmatprep.subr.bf16.mxu0 0
        %326 = vmatpush1.bf16.msra.mxu0 0
        %327 = vmatprep.subr.bf16.mxu0 0
        %328 = vmatpush1.bf16.msra.mxu0 0
        %329 = vmatprep.subr.bf16.mxu0 0
        %330 = vmatpush1.bf16.msra.mxu0 0
        %331 = vmatprep.subr.bf16.mxu0 0
        %332 = vmatpush1.bf16.msra.mxu0 0
        %333 = vmatprep.subr.bf16.mxu0 0
        %334 = vmatpush1.bf16.msra.mxu0 0
        %335 = vmatprep.subr.bf16.mxu0 0
        %336 = vmatpush1.bf16.msra.mxu0 0
        %337 = vmatprep.subr.bf16.mxu0 0
        %338 = vmatpush1.bf16.msra.mxu0 0
        %339 = vmatprep.subr.bf16.mxu0 0
        %340 = vmatpush1.bf16.msra.mxu0 0
        %341 = vmatprep.subr.bf16.mxu0 0
        %342 = vmatpush1.bf16.msra.mxu0 0
        %343 = vmatprep.subr.bf16.mxu0 0
        %344 = vmatpush1.bf16.msra.mxu0 0
        %345 = vmatprep.subr.bf16.mxu0 0
        %346 = vmatpush1.bf16.msra.mxu0 0
        %347 = vmatprep.subr.bf16.mxu0 0
        %348 = vmatpush1.bf16.msra.mxu0 0
        %349 = vmatprep.subr.bf16.mxu0 0
        %350 = vmatpush1.bf16.msra.mxu0 0
        %351 = vmatprep.subr.bf16.mxu0 0
        %352 = vmatpush1.bf16.msra.mxu0 0
        %353 = vmatprep.mubr.bf16.mxu0 0
        %354 = vmatmul.mubr.bf16.gmra.mrb[0].mxu0 %v319
        %v355 = vpop.f32.mrb[0].mxu0
        %v356 = vadd.f32 %v305, %v355
        %v357 = vpop.f32.mrb[0].mxu0
        %v358 = vpop.f32.mrb[0].mxu0
        %v359 = vadd.f32 %v310, %v358
        %v360 = vpop.f32.mrb[0].mxu0
        %361 = vdwg.mxu0
        %v362 = vmax.f32 %v356, 0.0
        %v363 = vmax.f32 %v359, 0.0
        %v364 = vpack.c.bf16 %v363, %v362
        %v365 = vld [vmem:[%s3] sm:$0xf]
        %v366 = vld [vmem:[%s3 + $0x4] sm:$0xf]
        %v367 = vld [vmem:[%s3 + $0x8] sm:$0xf]
        %v368 = vld [vmem:[%s3 + $0xc] sm:$0xf]
        %v369 = vld [vmem:[%s4] sm:$0xff]
        %v370 = vld [vmem:[%s4 + $0x8] sm:$0xff]
        %v371 = vld [vmem:[%s4 + $0x10] sm:$0xff]
        %v372 = vld [vmem:[%s4 + $0x18] sm:$0xff]
        %374 = vset.pattern.permute.xlu0 0
        %375 = vperm.xlu0 %374, %v369
        %v376 = vpop.permute.xlu0 %375
        %379 = vset.pattern.permute.xlu0 0
        %380 = vperm.xlu0 %379, %v370
        %v381 = vpop.permute.xlu0 %380
        %384 = vset.pattern.permute.xlu0 0
        %385 = vperm.xlu0 %384, %v371
        %v386 = vpop.permute.xlu0 %385
        %389 = vset.pattern.permute.xlu0 0
        %390 = vperm.xlu0 %389, %v372
        %v391 = vpop.permute.xlu0 %390
        %v397 = vunpack.c.l.b16 %v365
        %v398 = vunpack.c.l.b16 %v366
        %v399 = vunpack.c.l.b16 %v367
        %v400 = vunpack.c.l.b16 %v368
        %v401 = vpack.c.b16 %v398, %v397
        %v402 = vpack.c.b16 %v400, %v399
        %v404 = vsel %vm317, %v401, 0
        %v407 = vsel %vm317, %v402, 0
        %409 = vmatprep.subr.bf16.mxu0 0
        %410 = vmatpush1.bf16.msra.mxu0 %v364
        %411 = vmatprep.subr.bf16.mxu0 0
        %412 = vmatpush1.bf16.msra.mxu0 0
        %413 = vmatprep.subr.bf16.mxu0 0
        %414 = vmatpush1.bf16.msra.mxu0 0
        %415 = vmatprep.subr.bf16.mxu0 0
        %416 = vmatpush1.bf16.msra.mxu0 0
        %417 = vmatprep.subr.bf16.mxu0 0
        %418 = vmatpush1.bf16.msra.mxu0 0
        %419 = vmatprep.subr.bf16.mxu0 0
        %420 = vmatpush1.bf16.msra.mxu0 0
        %421 = vmatprep.subr.bf16.mxu0 0
        %422 = vmatpush1.bf16.msra.mxu0 0
        %423 = vmatprep.subr.bf16.mxu0 0
        %424 = vmatpush1.bf16.msra.mxu0 0
        %425 = vmatprep.subr.bf16.mxu0 0
        %426 = vmatpush1.bf16.msra.mxu0 0
        %427 = vmatprep.subr.bf16.mxu0 0
        %428 = vmatpush1.bf16.msra.mxu0 0
        %429 = vmatprep.subr.bf16.mxu0 0
        %430 = vmatpush1.bf16.msra.mxu0 0
        %431 = vmatprep.subr.bf16.mxu0 0
        %432 = vmatpush1.bf16.msra.mxu0 0
        %433 = vmatprep.subr.bf16.mxu0 0
        %434 = vmatpush1.bf16.msra.mxu0 0
        %435 = vmatprep.subr.bf16.mxu0 0
        %436 = vmatpush1.bf16.msra.mxu0 0
        %437 = vmatprep.subr.bf16.mxu0 0
        %438 = vmatpush1.bf16.msra.mxu0 0
        %439 = vmatprep.subr.bf16.mxu0 0
        %440 = vmatpush1.bf16.msra.mxu0 0
        %441 = vmatprep.mubr.bf16.mxu0 0
        %442 = vmatmul.mubr.bf16.gmra.mrb[0].mxu0 %v404
        %v443 = vpop.f32.mrb[0].mxu0
        %v444 = vadd.f32 %v376, %v443
        %v445 = vpop.f32.mrb[0].mxu0
        %v446 = vpop.f32.mrb[0].mxu0
        %v447 = vadd.f32 %v381, %v446
        %v448 = vpop.f32.mrb[0].mxu0
        %449 = vmatprep.mubr.bf16.mxu0 0
        %450 = vmatmul.mubr.bf16.gmra.mrb[0].mxu0 %v407
        %v451 = vpop.f32.mrb[0].mxu0
        %v452 = vadd.f32 %v386, %v451
        %v453 = vpop.f32.mrb[0].mxu0
        %v454 = vpop.f32.mrb[0].mxu0
        %v455 = vadd.f32 %v391, %v454
        %v456 = vpop.f32.mrb[0].mxu0
        %457 = vdwg.mxu0
        %v458 = vmul.f32 %v444, %v444
        %v459 = vmul.f32 %v447, %v447
        %v460 = vmul.f32 %v452, %v452
        %v461 = vmul.f32 %v455, %v455
        %v462 = vadd.f32 %v458, %v459
        %v463 = vadd.f32 %v462, %v460
        %v464 = vadd.f32 %v463, %v461
        %v465 = vrot.slane %v464, 4
        %v466 = vadd.f32 %v464, %v465
        %v467 = vrot.slane %v466, 2
        %v468 = vadd.f32 %v466, %v467
        %v469 = vrot.slane %v468, 1
        %v470 = vadd.f32 %v468, %v469
        %v471 = vmax.f32 %v470, 1e-24
        %v472 = vrsqrt.pop %v471
        %v473 = vmul.f32 %v444, %v472
        %v474 = vmul.f32 %v447, %v472
        %v475 = vmul.f32 %v452, %v472
        %v476 = vmul.f32 %v455, %v472
        %477 = vst [vmem:[%s293] sm:$0xff] %v473
        %478 = vst [vmem:[%s293 + $0x8] sm:$0xff] %v474
        %479 = vst [vmem:[%s293 + $0x10] sm:$0xff] %v475
        %480 = vst [vmem:[%s293 + $0x18] sm:$0xff] %v476
        %s481 = sand.u32 %s154, 1
        %s482 = scalar_lea.sflag [#allocation5], %s481
        %s483 = sand.u32 %s154, 1
        %s484 = smul.addr %s483, 32
        %s485 = scalar_lea.vmem [#allocation6], %s484
        // Predicated region
        $region83: #{tpu_custom_call.1} parent=73 // pred_check
          %p486 = pneg %p164
        $region84: #{tpu_custom_call.1} parent=73 // pred_check_branch
          %488 = sbr.rel (%p486) target = $region86
        $region85: #{tpu_custom_call.1} parent=73 // pred_region
          %s490 = ssub.s32 512, 512
          %491 = vsyncadd %s482, %s490
          %s492 = smul.addr %s24, 8
          %s493 = sadd.s32 %s25, %s492
          %s494 = smul.addr %s493, 128
          %s495 = scalar_lea.hbm %s5, %s494
          %s496 = sshll.u32 %s485, 4
          %s497 = int_to_ptr.vmem [resolvable:$true] %s496
          %502 = dma.vmem_to_hbm [thread:$0]  %s497, 512, %s495, %s482, 128, 256, 8
        $region86: #{tpu_custom_call.1} parent=73 // pred_fallthru
          _
      $region74: #{tpu_custom_call.1} parent=5 // pred_fallthru
        _
      %p503 = scmp.le.s32.totalorder 2, %s15
      // Predicated region
      $region87: #{tpu_custom_call.1} parent=5 // pred_check
        %p504 = pneg %p503
      $region88: #{tpu_custom_call.1} parent=5 // pred_check_branch
        %506 = sbr.rel (%p504) target = $region90
      $region89: #{tpu_custom_call.1} parent=5 // pred_region
        %s507 = ssub.s32 %s15, 2
        // Predicated region
        $region91: #{tpu_custom_call.1} parent=89 // pred_check
          %p508 = pneg %p170
        $region92: #{tpu_custom_call.1} parent=89 // pred_check_branch
          %510 = sbr.rel (%p508) target = $region94
        $region93: #{tpu_custom_call.1} parent=89 // pred_region
          %s511 = sand.u32 %s155, 1
          %s512 = scalar_lea.sflag [#allocation5], %s511
          %s513 = sand.u32 %s155, 1
          %s514 = smul.addr %s513, 32
          %s515 = scalar_lea.vmem [#allocation6], %s514
          %516 = dma.done %s512, 512
        $region94: #{tpu_custom_call.1} parent=89 // pred_fallthru
          _
      $region90: #{tpu_custom_call.1} parent=5 // pred_fallthru
        _
    $region6: #{tpu_custom_call.1} parent=1 // loop_footer
      %s19 = sadd.s32 1, %s15
    $region7: #{tpu_custom_call.1} parent=1 // loop_footer_branch
      %14 = sbr.rel target = $region3
    $region8: #{tpu_custom_call.1} parent=1 // loop_exit
      _
    %517 = vsyncpa [#allocation4], 1
    %s518 = scalar_lea.sflag [#allocation4], 1
    %519 = vsyncpa %s518, 1
    %520 = vsyncpa [#allocation5], 1
    %s521 = scalar_lea.sflag [#allocation5], 1
    %522 = vsyncpa %s521, 1

</llo_original>
